<compile_context>
chip_gen: v5e
topology: v5e:2x2
jax: 0.10.0
libtpu: 0.0.40
codegen_flags: <defaults>
</compile_context>

<pallas_src>
import jax
import jax.numpy as jnp
import numpy as np
from jax.experimental import pallas as pl
from jax.experimental.pallas import tpu as pltpu


def _weak_cam_init_loss_kernel(slab_ref, col_ref, out_ref):
    """One fused pass: e = G - (A*s + t); loss = sum(e*e * w).

    slab_ref : VMEM [4B+1, J] f32
        rows [0 , 2B) : body-joint x rows (batches 0..B-1), then y rows  (A)
        rows [2B, 4B) : GT 2D joint x rows, then y rows                  (G)
        row  [4B]     : per-joint selection count * data_weight**2       (w)
    col_ref  : VMEM [2B, 2] f32
        col 0 : weak-perspective scale per row (scale repeated for x and y rows)
        col 1 : weak-perspective translation per row (tx for x rows, ty for y rows)
    out_ref  : VMEM [1, 1] f32 scalar loss
    """
    rows = slab_ref.shape[0]
    n = (rows - 1) // 2                       # 2B

    a = slab_ref[0:n, :]                      # [2B, J] joints planes
    g = slab_ref[n:2 * n, :]                  # [2B, J] GT planes
    w = slab_ref[2 * n:2 * n + 1, :]          # [1, J]  selection weights * dw^2

    s = col_ref[:, 0:1]                       # [2B, 1] scale, broadcast over lanes (J)
    t = col_ref[:, 1:2]                       # [2B, 1] translation

    e = g - (a * s + t)                       # weak-perspective projection + diff
    out_ref[...] = jnp.sum(e * e * w, keepdims=True)   # masked squared error, reduced


@jax.jit
def smplify_weak_camera_init_loss(joints, gt_joints_2d, init_joints_idxs,
                                  cam_scale, cam_trans, data_weight=1.0):
    """JAX wrapper: only lane-dense repacking (layout plumbing) stays outside the kernel.

    joints          : [B, J, 3] body-model joints
    gt_joints_2d    : [B, J, 2] ground-truth 2D keypoints
    init_joints_idxs: [K]       int joint indices used for camera init
    cam_scale       : [B]       weak-perspective scale
    cam_trans       : [B, 2]    weak-perspective 2D translation
    """
    B, J, _ = joints.shape

    # Lane-dense repack: J (long axis) -> lanes; x rows then y rows on sublanes.
    a = jnp.transpose(joints[..., :2].astype(jnp.float32), (2, 0, 1)).reshape(2 * B, J)
    g = jnp.transpose(gt_joints_2d.astype(jnp.float32), (2, 0, 1)).reshape(2 * B, J)

    # Selection weights: per-joint count (exact index_select semantics incl. duplicates)
    # with data_weight**2 folded in. Out-of-range indices would silently contribute 0
    # here, whereas torch.index_select would raise.
    dw2 = jnp.asarray(data_weight, jnp.float32) ** 2
    wrow = (jnp.zeros((J,), jnp.float32)
            .at[init_joints_idxs.astype(jnp.int32)].add(1.0) * dw2).reshape(1, J)

    slab = jnp.concatenate([a, g, wrow], axis=0)                       # [4B+1, J]

    scale = cam_scale.astype(jnp.float32).reshape(B, 1)
    scol = jnp.concatenate([scale, scale], axis=0)                     # [2B, 1]
    tcol = jnp.transpose(cam_trans.astype(jnp.float32)).reshape(2 * B, 1)  # tx..., ty...
    cols = jnp.concatenate([scol, tcol], axis=1)                       # [2B, 2]

    out = pl.pallas_call(
        _weak_cam_init_loss_kernel,
        out_shape=jax.ShapeDtypeStruct((1, 1), jnp.float32),
        in_specs=[pl.BlockSpec(memory_space=pltpu.MemorySpace.VMEM),   # slab
                  pl.BlockSpec(memory_space=pltpu.MemorySpace.VMEM)],  # cols
        out_specs=pl.BlockSpec(memory_space=pltpu.MemorySpace.VMEM),
        compiler_params=pltpu.CompilerParams(allow_input_fusion=[True, True]),
    )(slab, cols)
    return out[0, 0]


def _reference_loss(joints, gt_joints_2d, init_joints_idxs, cam_scale, cam_trans,
                    data_weight=1.0):
    """Pure-JAX reference mirroring the PyTorch forward, for correctness check."""
    proj = joints[..., :2] * cam_scale[:, None, None] + cam_trans[:, None, :]
    sel_gt = jnp.take(gt_joints_2d, init_joints_idxs, axis=1)
    sel_pr = jnp.take(proj, init_joints_idxs, axis=1)
    return jnp.sum((sel_gt - sel_pr) ** 2) * (data_weight ** 2)


if __name__ == "__main__":
    # Small, deterministic shapes consistent with the module:
    #   batch B=2, J=16 body joints (3D), K=8 init joint indices, 2D GT keypoints.
    B, J, K = 2, 16, 8
    key = jax.random.PRNGKey(0)
    k1, k2, k3, k4 = jax.random.split(key, 4)

    joints = jax.random.normal(k1, (B, J, 3), dtype=jnp.float32)        # body_model_output.joints
    gt_joints_2d = jax.random.normal(k2, (B, J, 2), dtype=jnp.float32)  # keypoint targets
    cam_scale = jax.random.uniform(k3, (B,), dtype=jnp.float32, minval=0.5, maxval=2.0)
    cam_trans = jax.random.normal(k4, (B, 2), dtype=jnp.float32)
    init_joints_idxs = jnp.array([0, 2, 5, 7, 8, 10, 12, 15], dtype=jnp.int32)
    data_weight = 1.0
    # TODO(synk): depth_loss_weight / trans_estimation are registered in __init__ but unused
    # in this forward, so they are intentionally omitted.

    loss = smplify_weak_camera_init_loss(joints, gt_joints_2d, init_joints_idxs,
                                         cam_scale, cam_trans, data_weight)
    loss = jax.block_until_ready(loss)

    ref = _reference_loss(joints, gt_joints_2d, init_joints_idxs,
                          cam_scale, cam_trans, data_weight)
    np.testing.assert_allclose(np.asarray(loss), np.asarray(ref), rtol=1e-5, atol=1e-5)

    print("KERNEL_OK")
</pallas_src>

<mosaic_0001>
module attributes {stable_mosaic.version = 11 : i64} {
  func.func @_weak_cam_init_loss_kernel(%arg0: memref<9x16xf32, #tpu.memory_space<vmem>>, %arg1: memref<4x2xf32, #tpu.memory_space<vmem>>, %arg2: memref<1x1xf32, #tpu.memory_space<vmem>>) attributes {dimension_semantics = [], scalar_prefetch = 0 : i64, scratch_operands = 0 : i64, tpu.core_type = #tpu.core_type<tc>} {
    %c0 = arith.constant 0 : index
    %c0_0 = arith.constant 0 : index
    %0 = vector.load %arg0[%c0, %c0_0] : memref<9x16xf32, #tpu.memory_space<vmem>>, vector<4x16xf32>
    %c4 = arith.constant 4 : index
    %c0_1 = arith.constant 0 : index
    %1 = vector.load %arg0[%c4, %c0_1] : memref<9x16xf32, #tpu.memory_space<vmem>>, vector<4x16xf32>
    %c8 = arith.constant 8 : index
    %c0_2 = arith.constant 0 : index
    %2 = vector.load %arg0[%c8, %c0_2] : memref<9x16xf32, #tpu.memory_space<vmem>>, vector<1x16xf32>
    %c0_3 = arith.constant 0 : index
    %c0_4 = arith.constant 0 : index
    %3 = vector.load %arg1[%c0_3, %c0_4] : memref<4x2xf32, #tpu.memory_space<vmem>>, vector<4x1xf32>
    %c0_5 = arith.constant 0 : index
    %c1 = arith.constant 1 : index
    %4 = vector.load %arg1[%c0_5, %c1] : memref<4x2xf32, #tpu.memory_space<vmem>>, vector<4x1xf32>
    %5 = vector.broadcast %3 : vector<4x1xf32> to vector<4x16xf32>
    %6 = arith.mulf %0, %5 : vector<4x16xf32>
    %7 = vector.broadcast %4 : vector<4x1xf32> to vector<4x16xf32>
    %8 = arith.addf %6, %7 : vector<4x16xf32>
    %9 = arith.subf %1, %8 : vector<4x16xf32>
    %10 = arith.mulf %9, %9 : vector<4x16xf32>
    %11 = vector.broadcast %2 : vector<1x16xf32> to vector<4x16xf32>
    %12 = arith.mulf %10, %11 : vector<4x16xf32>
    %13 = vector.shape_cast %12 : vector<4x16xf32> to vector<1x4x16xf32>
    %cst = arith.constant dense<0.000000e+00> : vector<1xf32>
    %14 = vector.multi_reduction <add>, %13, %cst [1, 2] : vector<1x4x16xf32> to vector<1xf32>
    %15 = vector.shape_cast %14 : vector<1xf32> to vector<1x1x1xf32>
    %16 = vector.extract %15[0, 0, 0] : f32 from vector<1x1x1xf32>
    %17 = vector.broadcast %16 : f32 to vector<1x1xf32>
    %c0_6 = arith.constant 0 : index
    %c0_7 = arith.constant 0 : index
    %18 = vector.load %arg2[%c0_6, %c0_7] : memref<1x1xf32, #tpu.memory_space<vmem>>, vector<1x1xf32>
    tpu.vector_store %arg2[%c0_6, %c0_7], %17 {strides = array<i32>} : memref<1x1xf32, #tpu.memory_space<vmem>>, vector<1x1xf32>,
    return
  }
}

</mosaic_0001>

<llo_original>
// kernel: smplify_weak_camera_init_loss.2
$region0: #{smplify_weak_camera_init_loss.2}
  #allocation0 [shape = 'u32[]', space=smem, size = 0x4, offset = 0x4, fixed_abs, tag = 'smem constant byte address 0x4 - core index']
  #allocation1 [shape = 'u32[72,128]{1,0:T(1,128)}', space=vmem, size = 0x9000, scoped, tag = 'internal scratch']
  #allocation2 [shape = 'u32[2048]{0}', space=vmem, size = 0x2000, scoped, tag = 'scoped memory for smplify_weak_camera_init_loss.2']
  #allocation3 [shape = 'u32[2048]{0}', space=vmem, size = 0x2000, scoped, tag = 'scoped memory for smplify_weak_camera_init_loss.2']
  #allocation4 [shape = 'u32[2048]{0}', space=vmem, size = 0x2000, scoped, tag = 'scoped memory for smplify_weak_camera_init_loss.2']
  #allocation5 [shape = 'u32[2048]{0}', space=vmem, size = 0x2000, scoped, tag = 'scoped memory for smplify_weak_camera_init_loss.2']
  #allocation6 [shape = 'u32[2048]{0}', space=vmem, size = 0x2000, scoped, tag = 'scoped memory for smplify_weak_camera_init_loss.2']
  #allocation7 [shape = 'u32[2048]{0}', space=vmem, size = 0x2000, scoped, tag = 'scoped memory for smplify_weak_camera_init_loss.2']
  #allocation8 [shape = 'u32[2048]{0}', space=vmem, size = 0x2000, scoped, tag = 'scoped memory for smplify_weak_camera_init_loss.2']
  #allocation9 [shape = 'u32[2048]{0}', space=vmem, size = 0x2000, scoped, tag = 'scoped memory for smplify_weak_camera_init_loss.2']
  #allocation10 [shape = 'u32[2048]{0}', space=vmem, size = 0x2000, scoped, tag = 'scoped memory for smplify_weak_camera_init_loss.2']
  #allocation11 [shape = 'u32[2048]{0}', space=vmem, size = 0x2000, scoped, tag = 'scoped memory for smplify_weak_camera_init_loss.2']
  #allocation12 [shape = 'u32[2048]{0}', space=vmem, size = 0x2000, scoped, tag = 'scoped memory for smplify_weak_camera_init_loss.2']
  #allocation13 [shape = 'u32[2048]{0}', space=vmem, size = 0x2000, scoped, tag = 'scoped memory for smplify_weak_camera_init_loss.2']
  #allocation14 [shape = 'u32[2048]{0}', space=vmem, size = 0x2000, scoped, tag = 'scoped memory for smplify_weak_camera_init_loss.2']
  #allocation15 [shape = 'u32[2048]{0}', space=vmem, size = 0x2000, scoped, tag = 'scoped memory for smplify_weak_camera_init_loss.2']
  #allocation16 [shape = 'u32[2048]{0}', space=vmem, size = 0x2000, scoped, tag = 'scoped memory for smplify_weak_camera_init_loss.2']
  #allocation17 [shape = 'u32[2048]{0}', space=vmem, size = 0x2000, scoped, tag = 'scoped memory for smplify_weak_camera_init_loss.2']
  #allocation18 [shape = 'u32[2048]{0}', space=vmem, size = 0x2000, scoped, tag = 'scoped memory for smplify_weak_camera_init_loss.2']
  #allocation19 [shape = 'u32[2048]{0}', space=vmem, size = 0x2000, scoped, tag = 'scoped memory for smplify_weak_camera_init_loss.2']
  #allocation20 [shape = 'u32[2048]{0}', space=vmem, size = 0x2000, scoped, tag = 'scoped memory for smplify_weak_camera_init_loss.2']
  #allocation21 [shape = 'u32[2048]{0}', space=vmem, size = 0x2000, scoped, tag = 'scoped memory for smplify_weak_camera_init_loss.2']
  #allocation22 [shape = 'u32[2048]{0}', space=vmem, size = 0x2000, scoped, tag = 'scoped memory for smplify_weak_camera_init_loss.2']
  #allocation23 [shape = 'u32[2048]{0}', space=vmem, size = 0x2000, scoped, tag = 'scoped memory for smplify_weak_camera_init_loss.2']
  #allocation24 [shape = 'u32[2048]{0}', space=vmem, size = 0x2000, scoped, tag = 'scoped memory for smplify_weak_camera_init_loss.2']
  #allocation25 [shape = 'u32[2048]{0}', space=vmem, size = 0x2000, scoped, tag = 'scoped memory for smplify_weak_camera_init_loss.2']
  #allocation26 [shape = 'u32[2048]{0}', space=vmem, size = 0x2000, scoped, tag = 'scoped memory for smplify_weak_camera_init_loss.2']
  %s0 = inlined_call_operand.vmem [shape: f32[1,16], index: 0, kind: input, shape index: {}]
  %s1 = inlined_call_operand.<no memory space> [shape: f32[], index: 1, kind: input, shape index: {}]
  %s2 = inlined_call_operand.vmem [shape: f32[4,16], index: 2, kind: input, shape index: {}]
  %s3 = inlined_call_operand.vmem [shape: f32[4,16], index: 3, kind: input, shape index: {}]
  %s4 = inlined_call_operand.vmem [shape: f32[4,1], index: 4, kind: input, shape index: {}]
  %s5 = inlined_call_operand.vmem [shape: f32[4,1], index: 5, kind: input, shape index: {}]
  %s6 = inlined_call_operand.hbm [shape: f32[1,1], index: 6, kind: output, shape index: {}]
  %s7 = sld [smem:[#allocation0]]
  $region30: #{smplify_weak_camera_init_loss.2} parent=0
    _
  %s9 = ssub.s32 1, %s7
  %s10 = scalar_select 0, %s9, %s7
  %v11 = vstv %s1
  %v12 = vstv %s1
  %v13 = vstv %s1
  %v14 = vstv %s1
  %v15 = vstv %s1
  $region1: #{smplify_weak_camera_init_loss.2} parent=0
    #allocation27 [shape = 'u8[512]{0}', space=vmem, size = 0x400, scoped, tag = 'output window, operand 0, single buffered']
    #allocation28 [shape = 's32[1]{0}', space=sflag, size = 0x4, scoped, tag = 'scoped memory for smplify_weak_camera_init_loss.2']
    #allocation29 [shape = 'u8[8192]{0}', space=vmem, size = 0x2000, dematerialized = true, scoped, tag = 'FusionAdapter Buffer %fusion.1 = f32[9,16]{1,0:T(8,128)} fusion(%param_0.15, %param_1.19, %param_2.13, %param_3.6), kind=kLoop, calls=%fused_computation.2.clone, metadata={op_name="jit(smplify_weak_camera_init_loss)/concatenate" stack_frame_id=14}']
    #allocation30 [shape = 'u8[2048]{0}', space=vmem, size = 0x800, dematerialized = true, scoped, tag = 'FusionAdapter Buffer %fusion.6 = f32[4,2]{1,0:T(4,128)} fusion(%param_4.4, %param_1.19, %param_5.2), kind=kLoop, calls=%fused_computation.8.clone, metadata={op_name="jit(smplify_weak_camera_init_loss)/concatenate" stack_frame_id=18}']
    %16 = vsyncpa [#allocation28], 0
    // Predicated region
    $region2: #{smplify_weak_camera_init_loss.2} parent=1 // pred_check
      _
    $region3: #{smplify_weak_camera_init_loss.2} parent=1 // pred_check_branch
      %18 = sbr.rel (0) target = $region5
    $region4: #{smplify_weak_camera_init_loss.2} parent=1 // pred_region
      %s20 = ssub.s32 1, 0
      %p21 = scmp.lt.s32.totalorder 0, 0
      %s22 = scalar_select %p21, 0, 0
      %s23 = scalar_lea.vmem %s0, %s22
      %s25 = ssub.s32 1, 0
    $region5: #{smplify_weak_camera_init_loss.2} parent=1 // pred_fallthru
      _
    // Predicated region
    $region6: #{smplify_weak_camera_init_loss.2} parent=1 // pred_check
      _
    $region7: #{smplify_weak_camera_init_loss.2} parent=1 // pred_check_branch
      %27 = sbr.rel (0) target = $region9
    $region8: #{smplify_weak_camera_init_loss.2} parent=1 // pred_region
      %s29 = ssub.s32 1, 0
      %s30 = smul.u32 4, %s29
      %p31 = scmp.lt.s32.totalorder 0, 0
      %s32 = scalar_select %p31, 0, 0
      %s33 = smul.addr %s32, 4
      %s34 = scalar_lea.vmem %s2, %s33
      %s36 = ssub.s32 1, 0
      %s37 = smul.u32 4, %s36
    $region9: #{smplify_weak_camera_init_loss.2} parent=1 // pred_fallthru
      _
    // Predicated region
    $region10: #{smplify_weak_camera_init_loss.2} parent=1 // pred_check
      _
    $region11: #{smplify_weak_camera_init_loss.2} parent=1 // pred_check_branch
      %39 = sbr.rel (0) target = $region13
    $region12: #{smplify_weak_camera_init_loss.2} parent=1 // pred_region
      _
    $region13: #{smplify_weak_camera_init_loss.2} parent=1 // pred_fallthru
      _
    // Predicated region
    $region14: #{smplify_weak_camera_init_loss.2} parent=1 // pred_check
      _
    $region15: #{smplify_weak_camera_init_loss.2} parent=1 // pred_check_branch
      %41 = sbr.rel (0) target = $region17
    $region16: #{smplify_weak_camera_init_loss.2} parent=1 // pred_region
      %s43 = ssub.s32 1, 0
      %s44 = smul.u32 4, %s43
      %p45 = scmp.lt.s32.totalorder 0, 0
      %s46 = scalar_select %p45, 0, 0
      %s47 = smul.addr %s46, 4
      %s48 = scalar_lea.vmem %s4, %s47
      %s50 = ssub.s32 1, 0
      %s51 = smul.u32 4, %s50
    $region17: #{smplify_weak_camera_init_loss.2} parent=1 // pred_fallthru
      _
    // Predicated region
    $region18: #{smplify_weak_camera_init_loss.2} parent=1 // pred_check
      _
    $region19: #{smplify_weak_camera_init_loss.2} parent=1 // pred_check_branch
      %53 = sbr.rel (0) target = $region21
    $region20: #{smplify_weak_camera_init_loss.2} parent=1 // pred_region
      _
    $region21: #{smplify_weak_camera_init_loss.2} parent=1 // pred_fallthru
      _
    %s55 = ssub.s32 1, 0
    %p56 = scmp.lt.s32.totalorder 0, 0
    %s57 = scalar_select %p56, 0, 0
    %s58 = scalar_lea.vmem %s0, %s57
    %s60 = ssub.s32 1, 0
    %s61 = smul.u32 4, %s60
    %p62 = scmp.lt.s32.totalorder 0, 0
    %s63 = scalar_select %p62, 0, 0
    %s64 = smul.addr %s63, 4
    %s65 = scalar_lea.vmem %s2, %s64
    %s67 = ssub.s32 1, 0
    %s68 = smul.u32 4, %s67
    %p69 = scmp.lt.s32.totalorder 0, 0
    %s70 = scalar_select %p69, 0, 0
    %s71 = smul.addr %s70, 4
    %s72 = scalar_lea.vmem %s4, %s71
    %s74 = ssub.s32 1, 0
    %p75 = scmp.lt.s32.totalorder 0, 0
    %s76 = scalar_select %p75, 0, 0
    %s77 = scalar_lea.vmem %s0, %s76
    %s79 = ssub.s32 1, 0
    %s81 = ssub.s32 1, 0
    %s82 = smul.u32 4, %s81
    %p83 = scmp.lt.s32.totalorder 0, 0
    %s84 = scalar_select %p83, 0, 0
    %s85 = smul.addr %s84, 4
    %s86 = scalar_lea.vmem %s2, %s85
    %s88 = ssub.s32 1, 0
    %s89 = smul.u32 4, %s88
    %s91 = ssub.s32 1, 0
    %s92 = smul.u32 4, %s91
    %p93 = scmp.lt.s32.totalorder 0, 0
    %s94 = scalar_select %p93, 0, 0
    %s95 = smul.addr %s94, 4
    %s96 = scalar_lea.vmem %s4, %s95
    %s98 = ssub.s32 1, 0
    %s99 = smul.u32 4, %s98
    %s100 = ssub.s32 0, 0
    %p101 = scmp.lt.s32.totalorder %s100, 0
    %s102 = scalar_select %p101, 0, 255
    %s103 = sand.u32 1, %s102
    %s104 = sand.u32 1, %s103
    %v105 = vld [vmem:[%s77] sm:%s104]
    %s106 = ssub.s32 0, 0
    %p107 = scmp.lt.s32.totalorder %s106, 0
    %s108 = scalar_select %p107, 0, 255
    %s109 = sand.u32 15, %s108
    %s110 = sand.u32 15, %s109
    %v111 = vld [vmem:[%s86] sm:%s110]
    %v112 = vlaneseq
    %v113 = vshrl.u32 %v112, 7
    %v114 = vadd.s32 %v113, 8
    %vm115 = vcmp.lt.s32.totalorder %v114, 12
    %v116 = vsel %vm115, %v111, %v12
    %v117 = vlaneseq
    %v118 = vand.u32 %v117, 127
    %vm120 = vcmp.lt.s32.totalorder %v118, 16
    %v121 = vsel %vm120, %v116, %v12
    %vm122 = vcmask 1043456
    %v123 = vsel %vm122, %v121, %v12
    %v124 = vrot.slane %v123, 4
    %v125 = vld [vmem:[%s3] sm:$0xf]
    %v126 = vlaneseq
    %v127 = vshrl.u32 %v126, 7
    %vm129 = vcmp.lt.s32.totalorder %v127, 4
    %v130 = vsel %vm129, %v125, %v13
    %v131 = vlaneseq
    %v132 = vand.u32 %v131, 127
    %vm134 = vcmp.lt.s32.totalorder %v132, 16
    %v135 = vsel %vm134, %v130, %v13
    %136 = xla_tuple %v135, %v124
    %137 = xla_tuple %136
    %v138 = vmax.f32 %v135, %v124
    %139 = xla_tuple %v138
    %140 = xla_tuple %v138, %v11
    %141 = xla_tuple %140
    %v142 = vmax.f32 %v138, %v11
    %143 = xla_tuple %v142
    %s145 = ssub.s32 256, 1
    %146 = vst [vmem:[#allocation29] sm:%s145] %v142
    %v147 = vlaneseq
    %v148 = vshrl.u32 %v147, 7
    %v149 = vadd.s32 %v148, 8
    %vm150 = vcmp.lt.s32.totalorder %v149, 9
    %v151 = vsel %vm150, %v105, %v11
    %v152 = vlaneseq
    %v153 = vand.u32 %v152, 127
    %vm155 = vcmp.lt.s32.totalorder %v153, 16
    %v156 = vsel %vm155, %v151, %v11
    %vm157 = vcmask 1043456
    %v158 = vsel %vm157, %v12, %v121
    %v159 = vrot.slane %v158, 4
    %160 = xla_tuple %v13, %v159
    %161 = xla_tuple %160
    %v162 = vmax.f32 %v13, %v159
    %163 = xla_tuple %v162
    %164 = xla_tuple %v162, %v156
    %165 = xla_tuple %164
    %v166 = vmax.f32 %v162, %v156
    %167 = xla_tuple %v166
    %s168 = scalar_lea.vmem [#allocation29], 8
    %s170 = ssub.s32 256, 1
    %171 = vst [vmem:[%s168] sm:%s170] %v166
    %s172 = ssub.s32 0, 0
    %p173 = scmp.lt.s32.totalorder %s172, 0
    %s174 = scalar_select %p173, 0, 255
    %s175 = sand.u32 15, %s174
    %s176 = sand.u32 15, %s175
    %v177 = vld [vmem:[%s96] sm:%s176]
    %v178 = vlaneseq
    %v179 = vshrl.u32 %v178, 7
    %vm181 = vcmp.lt.s32.totalorder %v179, 4
    %v182 = vsel %vm181, %v177, %v14
    %v183 = vlaneseq
    %v184 = vand.u32 %v183, 127
    %v185 = vadd.s32 %v184, 128
    %vm186 = vcmp.lt.s32.totalorder %v185, 129
    %v187 = vsel %vm186, %v182, %v14
    %v188 = vlaneseq
    %v189 = vand.u32 %v188, 127
    %vm190 = vcmp.lt.s32.totalorder %v189, 127
    %v191 = vsel %vm190, %v187, %v14
    %192 = vrot.lane.b32.xlu0 %v191, 1
    %v193 = vpop.permute.xlu0 %192
    %v194 = vld [vmem:[%s5] sm:$0xf]
    %v195 = vlaneseq
    %v196 = vshrl.u32 %v195, 7
    %vm198 = vcmp.lt.s32.totalorder %v196, 4
    %v199 = vsel %vm198, %v194, %v15
    %v200 = vlaneseq
    %v201 = vand.u32 %v200, 127
    %vm203 = vcmp.lt.s32.totalorder %v201, 1
    %v204 = vsel %vm203, %v199, %v15
    %205 = xla_tuple %v204, %v193
    %206 = xla_tuple %205
    %v207 = vmax.f32 %v204, %v193
    %208 = xla_tuple %v207
    %s210 = ssub.s32 16, 1
    %211 = vst [vmem:[#allocation30] sm:%s210] %v207
    %v212 = vld [vmem:[#allocation29] sm:$0xf]
    %v213 = vld [vmem:[#allocation29 + $0x4] sm:$0xf]
    %v214 = vld [vmem:[#allocation29 + $0x8] sm:$0x1]
    %v215 = vld [vmem:[#allocation30] sm:$0xf]
    %217 = vset.pattern.permute.xlu0 0
    %218 = vperm.xlu0 %217, %v215
    %v219 = vpop.permute.xlu0 %218
    %v221 = vmul.f32 %v212, %v219
    %222 = vset.pattern.permute.xlu0 1
    %223 = vperm.xlu0 %222, %v215
    %v224 = vpop.permute.xlu0 %223
    %v226 = vadd.f32 %v221, %v224
    %v227 = vsub.f32 %v213, %v226
    %v228 = vmul.f32 %v227, %v227
    %v229 = vperm.slane %v214, 0
    %v230 = vmul.f32 %v228, %v229
    %vm231 = vcmask 125952
    %v232 = vsel %vm231, %v230, 0.0
    %233 = vadd.xlane.f32.xlu0 %v232
    %v234 = vpop.xlane.xlu0 %233
    %v235 = vrot.slane %v234, 4
    %v236 = vadd.f32 %v234, %v235
    %v237 = vrot.slane %v236, 2
    %v238 = vadd.f32 %v236, %v237
    %v239 = vrot.slane %v238, 1
    %v240 = vadd.f32 %v238, %v239
    %s241 = vtos %v240
    %v242 = vstv %s241
    %vm243 = vcmask 0
    %244 = vst.msk [vmem:[#allocation27] sm:$0x1] %vm243, %v242
    // Predicated region
    $region22: #{smplify_weak_camera_init_loss.2} parent=1 // pred_check
      _
    $region23: #{smplify_weak_camera_init_loss.2} parent=1 // pred_check_branch
      %246 = sbr.rel (0) target = $region25
    $region24: #{smplify_weak_camera_init_loss.2} parent=1 // pred_region
      %248 = vsyncadd [#allocation28], 0
      %s250 = sshll.u32 [#allocation27], 4
      %s251 = int_to_ptr.vmem [resolvable:$true] %s250
      %s252 = sshll.u32 %s6, 4
      %s253 = int_to_ptr.hbm [resolvable:$true] %s252
      %255 = dma.vmem_to_hbm [thread:$0]  %s251, 16, %s253, [#allocation28]
    $region25: #{smplify_weak_camera_init_loss.2} parent=1 // pred_fallthru
      _
    // Predicated region
    $region26: #{smplify_weak_camera_init_loss.2} parent=1 // pred_check
      _
    $region27: #{smplify_weak_camera_init_loss.2} parent=1 // pred_check_branch
      %257 = sbr.rel (0) target = $region29
    $region28: #{smplify_weak_camera_init_loss.2} parent=1 // pred_region
      %259 = dma.done [#allocation28], 16
    $region29: #{smplify_weak_camera_init_loss.2} parent=1 // pred_fallthru
      _
    %260 = vsyncpa [#allocation28], 1

</llo_original>
